<compile_context>
chip_gen: v7x
topology: tpu7x:2x2x1
jax: 0.10.0
libtpu: 0.0.40
codegen_flags: <defaults>
</compile_context>

<pallas_src>
import functools

import jax
import jax.numpy as jnp
from jax.experimental import pallas as pl
from jax.experimental.pallas import tpu as pltpu

_MIB = 1024 * 1024


def _round_up(x, m):
    return ((x + m - 1) // m) * m


# --------------------------- generation parameters -------------------------- #

def _generation_params():
    """(data_budget_bytes, vmem_limit_bytes, num_tensorcores) for this part.

    v7x: 64 MiB VMEM per TensorCore, 2 TCs per chip.
    v5e/v6e: 128 MiB VMEM, 1 TC.  The physical VMEM capacity is used both to
    size slabs and as a proxy for the TC count.  Conservative v7x values are
    the fallback if the query is unavailable.
    """
    phys = 64 * _MIB
    try:
        info = pltpu.get_tpu_info()
        phys = int(getattr(info, "vmem_capacity_bytes", phys))
    except Exception:
        pass
    if phys >= 96 * _MIB:                 # v5e / v6e
        return 96 * _MIB, 112 * _MIB, 1
    return 40 * _MIB, 56 * _MIB, 2        # v7x (or unknown): keep headroom


# ------------------------------ tiling helper ------------------------------- #

def _choose_rows_tile(rows, t_in, t_out, itemsize, budget, num_tc):
    """Largest sublane-aligned rows tile whose double-buffered, *tile-padded*
    in+out slabs fit `budget`; on 2-TC parts (v7x) capped so the grid has at
    least 2 blocks when the row count allows it."""
    sub = max(8, (8 * 4) // itemsize)          # 8 f32 / 16 bf16 / 32 int8 sublanes
    lanes = _round_up(t_in, 128) + _round_up(t_out, 128)   # physical lane widths
    per_row = 2 * lanes * itemsize             # 2x = double-buffered input + output
    rt = max(sub, (budget // per_row) // sub * sub)
    if num_tc >= 2 and rows >= 2 * sub:
        rt = min(rt, _round_up(pl.cdiv(rows, 2), sub))     # >= 2 blocks for 2 TCs
    if rt >= rows:
        rt = rows                              # single full-extent block (always legal)
    return int(rt)


# --------------------------------- kernel ----------------------------------- #

def _pad_kernel(x_ref, o_ref, *, t_in):
    """rows x t_in  ->  rows x t_out, padding time by repeating the last frame.

    Store order: (1) splat the last frame across the FULL output width — an
    unmasked, lane-dense store; (2) overwrite the head [0, t_in) with the
    original frames — the only masked store.
    """
    rt, t_out = o_ref.shape
    last = x_ref[:, t_in - 1:t_in]                        # (rt, 1)
    o_ref[...] = jnp.broadcast_to(last, (rt, t_out))      # full-width unmasked store
    o_ref[:, :t_in] = x_ref[...]                          # masked head overwrite


# -------------------------------- wrapper ------------------------------------ #

def exact_length_adjuster(x, target_length: int = 196, *, _rows_tile_override=None):
    """Pallas/JAX implementation of ExactLengthAdjuster.forward, x: (B, C, T)."""
    B, C, T = x.shape

    # Identity: pure passthrough — no kernel launch, no HBM round trip.
    if T == target_length:
        return x

    # Truncation: keep the first `target_length` frames; the tail is never
    # read.  TODO(synk): when the consumer is another Pallas kernel, skip this
    # slice and bound its time index_map at `target_length` instead.
    if T > target_length:
        return x[:, :, :target_length]

    # Padding: flatten to a lane/sublane-dense (rows, T) slab and pad in time.
    rows = B * C
    x2 = x.reshape(rows, T)                               # free contiguous reshape

    budget, vmem_limit, num_tc = _generation_params()
    if _rows_tile_override is not None:                   # test-only knob
        rt = int(_rows_tile_override)
    else:
        rt = _choose_rows_tile(rows, T, target_length, x.dtype.itemsize,
                               budget, num_tc)
    grid = (pl.cdiv(rows, rt),)

    kernel = functools.partial(_pad_kernel, t_in=T)

    # Last dims of both blocks equal the full array extents (T / target), so
    # the (8,128) rule is satisfied; rows_tile is a sublane multiple or the
    # full row count, and a partial trailing row block is masked by the
    # pipeline automatically.
    out2 = pl.pallas_call(
        kernel,
        out_shape=jax.ShapeDtypeStruct((rows, target_length), x.dtype),
        grid=grid,
        in_specs=[pl.BlockSpec((rt, T), lambda r: (r, 0))],
        out_specs=pl.BlockSpec((rt, target_length), lambda r: (r, 0)),
        compiler_params=pltpu.CompilerParams(
            dimension_semantics=("parallel",),
            vmem_limit_bytes=vmem_limit,
        ),
    )(x2)
    return out2.reshape(B, C, target_length)


# ------------------------------- reference ----------------------------------- #

def _reference(x, target_length):
    """Pure-JAX reference mirroring the PyTorch forward."""
    T = x.shape[2]
    if T == target_length:
        return x
    elif T < target_length:
        extra = jnp.broadcast_to(
            x[:, :, -1:], (x.shape[0], x.shape[1], target_length - T))
        return jnp.concatenate([x, extra], axis=2)
    else:
        return x[:, :, :target_length]


# ---------------------------------- main -------------------------------------- #

if __name__ == "__main__":
    k1, k2 = jax.random.split(jax.random.PRNGKey(0))
    B, C, T = 2, 4, 16
    x = jax.random.normal(k1, (B, C, T), dtype=jnp.float32)

    # 1) Pad (T < target), small target -> Pallas kernel path.
    out_pad = jax.block_until_ready(exact_length_adjuster(x, 24))
    assert out_pad.shape == (B, C, 24)
    assert jnp.allclose(out_pad, _reference(x, 24))

    # 2) Pad to the module default target_length=196 (196-lane output block).
    out_196 = jax.block_until_ready(exact_length_adjuster(x, 196))
    assert out_196.shape == (B, C, 196)
    assert jnp.allclose(out_196, _reference(x, 196))

    # 3) Multi-block grid with a partial trailing row block (masked writes):
    #    rows = 3*4 = 12, forced rows_tile = 8 -> 2 grid blocks.
    x_odd = jax.random.normal(k2, (3, C, T), dtype=jnp.float32)
    out_odd = jax.block_until_ready(
        exact_length_adjuster(x_odd, 24, _rows_tile_override=8))
    assert out_odd.shape == (3, C, 24)
    assert jnp.allclose(out_odd, _reference(x_odd, 24))

    # 4) bf16 pad (exercises the 16-row sublane-multiple sizing path).
    x_bf16 = x.astype(jnp.bfloat16)
    out_bf = jax.block_until_ready(exact_length_adjuster(x_bf16, 24))
    assert out_bf.shape == (B, C, 24)
    assert jnp.allclose(out_bf.astype(jnp.float32),
                        _reference(x_bf16, 24).astype(jnp.float32))

    # 5) Truncate (T > target) -> wrapper-level slice, tail never read.
    out_tr = jax.block_until_ready(exact_length_adjuster(x, 8))
    assert out_tr.shape == (B, C, 8)
    assert jnp.allclose(out_tr, _reference(x, 8))

    # 6) Identity (T == target) -> returned as-is, no kernel launch.
    out_id = jax.block_until_ready(exact_length_adjuster(x, T))
    assert out_id.shape == (B, C, T)
    assert jnp.allclose(out_id, x)

    print("KERNEL_OK")
</pallas_src>

<mosaic_0001>
module attributes {stable_mosaic.version = 11 : i64} {
  func.func @_pad_kernel(%arg0: i32, %arg1: memref<8x16xf32, #tpu.memory_space<vmem>>, %arg2: memref<8x24xf32, #tpu.memory_space<vmem>>) attributes {dimension_semantics = [#tpu.dimension_semantics<parallel>], iteration_bounds = array<i64: 1>, scalar_prefetch = 0 : i64, scratch_operands = 0 : i64, tpu.core_type = #tpu.core_type<tc>, window_params = [{transform_indices = @transform_0, window_bounds = array<i64: 8, 16>}, {transform_indices = @transform_1, window_bounds = array<i64: 8, 24>}]} {
    %c0 = arith.constant 0 : index
    %c15 = arith.constant 15 : index
    %0 = vector.load %arg1[%c0, %c15] : memref<8x16xf32, #tpu.memory_space<vmem>>, vector<8x1xf32>
    %1 = vector.shape_cast %0 : vector<8x1xf32> to vector<8x1xf32>
    %2 = vector.broadcast %1 : vector<8x1xf32> to vector<8x24xf32>
    %c0_0 = arith.constant 0 : index
    %c0_1 = arith.constant 0 : index
    %3 = vector.load %arg2[%c0_0, %c0_1] : memref<8x24xf32, #tpu.memory_space<vmem>>, vector<8x24xf32>
    tpu.vector_store %arg2[%c0_0, %c0_1], %2 {strides = array<i32>} : memref<8x24xf32, #tpu.memory_space<vmem>>, vector<8x24xf32>,
    %c0_2 = arith.constant 0 : index
    %c0_3 = arith.constant 0 : index
    %4 = vector.load %arg1[%c0_2, %c0_3] : memref<8x16xf32, #tpu.memory_space<vmem>>, vector<8x16xf32>
    %c0_4 = arith.constant 0 : index
    %c0_5 = arith.constant 0 : index
    %5 = vector.load %arg2[%c0_4, %c0_5] : memref<8x24xf32, #tpu.memory_space<vmem>>, vector<8x16xf32>
    tpu.vector_store %arg2[%c0_4, %c0_5], %4 {strides = array<i32>} : memref<8x24xf32, #tpu.memory_space<vmem>>, vector<8x16xf32>,
    return
  }
  func.func @transform_0(%arg0: i32) -> (i32, i32) {
    %c0_i32 = arith.constant 0 : i32
    %c0_i32_0 = arith.constant 0 : i32
    return %arg0, %c0_i32 : i32, i32
  }
  func.func @transform_1(%arg0: i32) -> (i32, i32) {
    %c0_i32 = arith.constant 0 : i32
    %c0_i32_0 = arith.constant 0 : i32
    return %arg0, %c0_i32 : i32, i32
  }
}

</mosaic_0001>

<llo_original>
// kernel: tpu_custom_call.1
$region0: #{tpu_custom_call.1}
  #allocation0 [shape = 'u32[]', space=smem, size = 0x4, offset = 0x4, fixed_abs, tag = 'smem constant byte address 0x4 - core index']
  #allocation1 [shape = 'u32[144,128]{1,0:T(1,128)}', space=vmem, size = 0x12000, scoped, tag = 'internal scratch']
  %s0 = inlined_call_operand.hbm [shape: f32[8,16], index: 0, kind: input, shape index: {}]
  %s1 = inlined_call_operand.hbm [shape: f32[8,24], index: 1, kind: output, shape index: {}]
  %s2 = sld [smem:[#allocation0]]
  $region18: #{tpu_custom_call.1} parent=0
    _
  %s4 = ssub.s32 1, %s2
  %s5 = scalar_select 0, %s4, %s2
  $region1: #{tpu_custom_call.1} parent=0
    #allocation2 [shape = 'u8[4096]{0}', space=vmem, size = 0x1000, scoped, tag = 'input window, operand 0, single buffered']
    #allocation3 [shape = 's32[1]{0}', space=sflag, size = 0x4, scoped, tag = 'scoped memory for tpu_custom_call.1']
    #allocation4 [shape = 's32[1]{0}', space=sflag, size = 0x4, scoped, tag = 'scoped memory for tpu_custom_call.1']
    #allocation5 [shape = 'u8[4096]{0}', space=vmem, size = 0x1000, scoped, tag = 'output window, operand 0, single buffered']
    %6 = vsyncpa [#allocation3], 0
    %7 = vsyncpa [#allocation4], 0
    // Predicated region
    $region2: #{tpu_custom_call.1} parent=1 // pred_check
      _
    $region3: #{tpu_custom_call.1} parent=1 // pred_check_branch
      %9 = sbr.rel (0) target = $region5
    $region4: #{tpu_custom_call.1} parent=1 // pred_region
      %s11 = ssub.s32 128, 128
      %12 = vsyncadd [#allocation3], %s11
      %s14 = sshll.u32 [#allocation2], 4
      %s15 = int_to_ptr.vmem [resolvable:$true] %s14
      %17 = dma.hbm_to_vmem [thread:$0]  %s0, 128, %s15, [#allocation3]
    $region5: #{tpu_custom_call.1} parent=1 // pred_fallthru
      _
    // Predicated region
    $region6: #{tpu_custom_call.1} parent=1 // pred_check
      _
    $region7: #{tpu_custom_call.1} parent=1 // pred_check_branch
      %19 = sbr.rel (0) target = $region9
    $region8: #{tpu_custom_call.1} parent=1 // pred_region
      %20 = dma.done [#allocation3], 128
    $region9: #{tpu_custom_call.1} parent=1 // pred_fallthru
      _
    %v21 = vld [vmem:[#allocation2] sm:$0xff]
    %23 = vset.pattern.permute.xlu0 15
    %24 = vperm.xlu0 %23, %v21
    %v25 = vpop.permute.xlu0 %24
    %vm27 = vcmask 195584
    %28 = vst.msk [vmem:[#allocation5] sm:$0xff] %vm27, %v25
    %v29 = vld [vmem:[#allocation2] sm:$0xff]
    %vm30 = vcmask 130048
    %31 = vst.msk [vmem:[#allocation5] sm:$0xff] %vm30, %v29
    // Predicated region
    $region10: #{tpu_custom_call.1} parent=1 // pred_check
      _
    $region11: #{tpu_custom_call.1} parent=1 // pred_check_branch
      %33 = sbr.rel (0) target = $region13
    $region12: #{tpu_custom_call.1} parent=1 // pred_region
      %s35 = ssub.s32 128, 128
      %36 = vsyncadd [#allocation4], %s35
      %s38 = sshll.u32 [#allocation5], 4
      %s39 = int_to_ptr.vmem [resolvable:$true] %s38
      %41 = dma.vmem_to_hbm [thread:$0]  %s39, 128, %s1, [#allocation4]
    $region13: #{tpu_custom_call.1} parent=1 // pred_fallthru
      _
    // Predicated region
    $region14: #{tpu_custom_call.1} parent=1 // pred_check
      _
    $region15: #{tpu_custom_call.1} parent=1 // pred_check_branch
      %43 = sbr.rel (0) target = $region17
    $region16: #{tpu_custom_call.1} parent=1 // pred_region
      %44 = dma.done [#allocation4], 128
    $region17: #{tpu_custom_call.1} parent=1 // pred_fallthru
      _
    %45 = vsyncpa [#allocation3], 1
    %46 = vsyncpa [#allocation4], 1

</llo_original>
